<compile_context>
chip_gen: v7x
topology: tpu7x:2x2x1
jax: 0.10.0
libtpu: 0.0.40
codegen_flags: <defaults>
</compile_context>

<pallas_src>
import functools

import jax
import jax.numpy as jnp
from jax.experimental import pallas as pl
from jax.experimental.pallas import tpu as pltpu


# ----------------------------------------------------------------------------
# pltpu.roll direction probe: we need shifted[f] = x[(f + s) mod N].  To be
# robust against the rotate-direction convention, probe it once on device and
# pick the sign accordingly (static Python constant at trace time).
# ----------------------------------------------------------------------------
def _roll_probe_kernel(x_ref, o_ref):
    o_ref[...] = pltpu.roll(x_ref[...], 1, 1)


@functools.lru_cache(maxsize=None)
def _roll_matches_numpy() -> bool:
    """True iff pltpu.roll follows np.roll semantics (out[i] = in[i - shift])."""
    x = jnp.arange(8 * 128, dtype=jnp.float32).reshape(8, 128)
    y = pl.pallas_call(
        _roll_probe_kernel,
        out_shape=jax.ShapeDtypeStruct((8, 128), jnp.float32),
    )(x)
    y = jax.block_until_ready(y)
    return bool(y[0, 1] == x[0, 0])


# ----------------------------------------------------------------------------
# Kernel
# ----------------------------------------------------------------------------
def context_processor_kernel(frame_ref, state_ref, w1_ref, b1_ref, w2_ref,
                             b2_ref, out_ref, both_ref, *, H, W, roll_sign):
    # frame_ref: (1, Cf, H*W)     state_ref: (1, Cs, H*W)
    # w1_ref   : (Cmid, 9*Cin1)   b1_ref   : (Cmid, 1)
    # w2_ref   : (Cs,   9*Cmid)   b2_ref   : (Cs, 1)
    # out_ref  : (1, Cs, H*W)
    # both_ref : VMEM scratch (Cin1, H*W) f32  -- in-kernel channel concat
    HW = H * W
    Cf = frame_ref.shape[1]
    Cs = state_ref.shape[1]
    Cin1 = Cf + Cs

    # Channel concat of frame & state inside the kernel (no wrapper HBM concat).
    both_ref[0:Cf, :] = frame_ref[0].astype(jnp.float32)
    both_ref[Cf:Cin1, :] = state_ref[0].astype(jnp.float32)
    both = both_ref[...]                                   # (Cin1, HW) f32

    # Flat pixel index f = y*W + x and column index x (hoisted constants).
    ff = jax.lax.broadcasted_iota(jnp.int32, (1, HW), 1)
    xx = ff % W

    def shifted_tap(src, dh, dw):
        # tap[:, y*W + x] = src[:, (y+dh)*W + (x+dw)] if in-bounds else 0
        s = dh * W + dw
        if s == 0:
            t = src
        else:
            t = pltpu.roll(src, (roll_sign * s) % HW, 1)
        mask = None
        if dh > 0:
            mask = ff < (H - dh) * W
        elif dh < 0:
            mask = ff >= (-dh) * W
        if dw > 0:
            m = xx < (W - dw)
            mask = m if mask is None else jnp.logical_and(mask, m)
        elif dw < 0:
            m = xx >= (-dw)
            mask = m if mask is None else jnp.logical_and(mask, m)
        if mask is not None:
            t = jnp.where(mask, t, 0.0)
        return t

    def conv3x3(src, w_ref_, b_ref_, d):
        # im2col: one fused MXU matmul with K = 9*C (tap order = kh-major,
        # kw-minor, channel fastest -- matches the wrapper's weight reshape).
        taps = [shifted_tap(src, dh, dw)
                for dh in (-d, 0, d) for dw in (-d, 0, d)]
        patches = jnp.concatenate(taps, axis=0)            # (9*C, HW)
        acc = jax.lax.dot_general(
            w_ref_[...], patches,
            dimension_numbers=(((1,), (0,)), ((), ())),
            preferred_element_type=jnp.float32)             # (Cout, HW)
        return acc + b_ref_[...]                            # lane-broadcast bias

    hidden = jnp.maximum(conv3x3(both, w1_ref, b1_ref, 1), 0.0)   # (Cmid, HW)
    delta = conv3x3(hidden, w2_ref, b2_ref, 2)                    # (Cs, HW)

    # Residual add in f32, lane-dense (Cs, HW) store.
    out_ref[0] = (state_ref[0].astype(jnp.float32) + delta).astype(out_ref.dtype)


# ----------------------------------------------------------------------------
# Wrapper
# ----------------------------------------------------------------------------
def context_processor(frame, state, w1, b1, w2, b2):
    """frame: (B, nc_frame, H, W) NCHW; state: (B, nc_state, H, W) NCHW.
    w1: (3,3,Cin1,Cmid) HWIO, w2: (3,3,Cmid,Cs) HWIO."""
    B, Cf, H, W = frame.shape
    Cs = state.shape[1]
    Cin1 = Cf + Cs
    Cmid = w1.shape[3]
    HW = H * W

    # Free reshapes only -- no HBM transpose / concat / pad in the wrapper.
    frame_r = frame.reshape(B, Cf, HW)
    state_r = state.reshape(B, Cs, HW)

    # HWIO -> (Cout, 9*Cin) with column = (kh*3 + kw)*Cin + cin (tiny arrays).
    w1_2d = jnp.transpose(w1, (3, 0, 1, 2)).reshape(Cmid, 9 * Cin1)
    w2_2d = jnp.transpose(w2, (3, 0, 1, 2)).reshape(Cs, 9 * Cmid)
    b1_c = b1.reshape(Cmid, 1).astype(jnp.float32)
    b2_c = b2.reshape(Cs, 1).astype(jnp.float32)

    roll_sign = -1 if _roll_matches_numpy() else 1

    kernel = functools.partial(context_processor_kernel, H=H, W=W,
                               roll_sign=roll_sign)

    out = pl.pallas_call(
        kernel,
        out_shape=jax.ShapeDtypeStruct((B, Cs, HW), state.dtype),
        grid_spec=pltpu.PrefetchScalarGridSpec(
            num_scalar_prefetch=0,
            grid=(B,),
            in_specs=[
                pl.BlockSpec((1, Cf, HW), lambda b: (b, 0, 0)),
                pl.BlockSpec((1, Cs, HW), lambda b: (b, 0, 0)),
                pl.BlockSpec((Cmid, 9 * Cin1), lambda b: (0, 0)),
                pl.BlockSpec((Cmid, 1), lambda b: (0, 0)),
                pl.BlockSpec((Cs, 9 * Cmid), lambda b: (0, 0)),
                pl.BlockSpec((Cs, 1), lambda b: (0, 0)),
            ],
            out_specs=pl.BlockSpec((1, Cs, HW), lambda b: (b, 0, 0)),
            scratch_shapes=[pltpu.VMEM((Cin1, HW), jnp.float32)],
        ),
        compiler_params=pltpu.CompilerParams(
            dimension_semantics=("parallel",)),
    )(frame_r, state_r, w1_2d, b1_c, w2_2d, b2_c)

    return out.reshape(B, Cs, H, W)   # free reshape back to NCHW


# ----------------------------------------------------------------------------
# Pure-JAX reference (matches PyTorch semantics, NCHW in/out)
# ----------------------------------------------------------------------------
def reference(frame, state, w1, b1, w2, b2):
    frame_nhwc = jnp.transpose(frame, (0, 2, 3, 1))
    state_nhwc = jnp.transpose(state, (0, 2, 3, 1))
    both = jnp.concatenate([frame_nhwc, state_nhwc], axis=-1)
    dn = ('NHWC', 'HWIO', 'NHWC')
    h = jax.lax.conv_general_dilated(
        both, w1, window_strides=(1, 1), padding=((1, 1), (1, 1)),
        dimension_numbers=dn, precision=jax.lax.Precision.HIGHEST) + b1
    h = jnp.maximum(h, 0.0)
    d = jax.lax.conv_general_dilated(
        h, w2, window_strides=(1, 1), padding=((2, 2), (2, 2)),
        rhs_dilation=(2, 2), dimension_numbers=dn,
        precision=jax.lax.Precision.HIGHEST) + b2
    out = state_nhwc + d
    return jnp.transpose(out, (0, 3, 1, 2))


if __name__ == "__main__":
    # Small, module-consistent shapes.
    B, nc_frame, nc_state, H, W = 2, 4, 4, 16, 16
    Cin1, Cmid = nc_frame + nc_state, nc_state * 2

    key = jax.random.PRNGKey(0)
    k1, k2, k3, k4, k5, k6 = jax.random.split(key, 6)

    frame = jax.random.normal(k1, (B, nc_frame, H, W), jnp.float32)
    state = jax.random.normal(k2, (B, nc_state, H, W), jnp.float32)

    # Deterministic synthetic conv parameters (HWIO layout).
    w1 = jax.random.normal(k3, (3, 3, Cin1, Cmid), jnp.float32) * 0.1
    b1 = jax.random.normal(k4, (Cmid,), jnp.float32) * 0.1
    w2 = jax.random.normal(k5, (3, 3, Cmid, nc_state), jnp.float32) * 0.1
    b2 = jax.random.normal(k6, (nc_state,), jnp.float32) * 0.1

    out = context_processor(frame, state, w1, b1, w2, b2)
    out = jax.block_until_ready(out)

    ref = jax.block_until_ready(reference(frame, state, w1, b1, w2, b2))
    err = float(jnp.max(jnp.abs(out - ref)))
    assert out.shape == (B, nc_state, H, W)
    assert err < 1e-3, f"max abs error {err}"
    print("KERNEL_OK")
</pallas_src>

<mosaic_0001>
module attributes {stable_mosaic.version = 11 : i64} {
  func.func @_roll_probe_kernel(%arg0: memref<8x128xf32, #tpu.memory_space<vmem>>, %arg1: memref<8x128xf32, #tpu.memory_space<vmem>>) attributes {dimension_semantics = [], scalar_prefetch = 0 : i64, scratch_operands = 0 : i64, tpu.core_type = #tpu.core_type<tc>} {
    %c0 = arith.constant 0 : index
    %c0_0 = arith.constant 0 : index
    %0 = vector.load %arg0[%c0, %c0_0] : memref<8x128xf32, #tpu.memory_space<vmem>>, vector<8x128xf32>
    %c1_i32 = arith.constant 1 : i32
    %1 = tpu.dynamic_rotate %0 by %c1_i32 dim 1 : vector<8x128xf32>, i32 -> vector<8x128xf32>
    %c0_1 = arith.constant 0 : index
    %c0_2 = arith.constant 0 : index
    %2 = vector.load %arg1[%c0_1, %c0_2] : memref<8x128xf32, #tpu.memory_space<vmem>>, vector<8x128xf32>
    tpu.vector_store %arg1[%c0_1, %c0_2], %1 {strides = array<i32>} : memref<8x128xf32, #tpu.memory_space<vmem>>, vector<8x128xf32>,
    return
  }
}

</mosaic_0001>

<llo_original>
// kernel: tpu_custom_call.1
$region0: #{tpu_custom_call.1}
  #allocation0 [shape = 'u32[]', space=smem, size = 0x4, offset = 0x4, fixed_abs, tag = 'smem constant byte address 0x4 - core index']
  #allocation1 [shape = 'u32[144,128]{1,0:T(1,128)}', space=vmem, size = 0x12000, scoped, tag = 'internal scratch']
  %s0 = inlined_call_operand.hbm [shape: f32[8,128], index: 0, kind: input, shape index: {}]
  %s1 = inlined_call_operand.hbm [shape: f32[8,128], index: 1, kind: output, shape index: {}]
  %s2 = sld [smem:[#allocation0]]
  $region18: #{tpu_custom_call.1} parent=0
    _
  %s4 = ssub.s32 1, %s2
  %s5 = scalar_select 0, %s4, %s2
  $region1: #{tpu_custom_call.1} parent=0
    #allocation2 [shape = 'u8[4096]{0}', space=vmem, size = 0x1000, scoped, tag = 'input window, operand 0, single buffered']
    #allocation3 [shape = 's32[1]{0}', space=sflag, size = 0x4, scoped, tag = 'scoped memory for tpu_custom_call.1']
    #allocation4 [shape = 's32[1]{0}', space=sflag, size = 0x4, scoped, tag = 'scoped memory for tpu_custom_call.1']
    #allocation5 [shape = 'u8[4096]{0}', space=vmem, size = 0x1000, scoped, tag = 'output window, operand 0, single buffered']
    %6 = vsyncpa [#allocation3], 0
    %7 = vsyncpa [#allocation4], 0
    // Predicated region
    $region2: #{tpu_custom_call.1} parent=1 // pred_check
      _
    $region3: #{tpu_custom_call.1} parent=1 // pred_check_branch
      %9 = sbr.rel (0) target = $region5
    $region4: #{tpu_custom_call.1} parent=1 // pred_region
      %s11 = ssub.s32 128, 128
      %12 = vsyncadd [#allocation3], %s11
      %s14 = sshll.u32 [#allocation2], 4
      %s15 = int_to_ptr.vmem [resolvable:$true] %s14
      %17 = dma.hbm_to_vmem [thread:$0]  %s0, 128, %s15, [#allocation3]
    $region5: #{tpu_custom_call.1} parent=1 // pred_fallthru
      _
    // Predicated region
    $region6: #{tpu_custom_call.1} parent=1 // pred_check
      _
    $region7: #{tpu_custom_call.1} parent=1 // pred_check_branch
      %19 = sbr.rel (0) target = $region9
    $region8: #{tpu_custom_call.1} parent=1 // pred_region
      %20 = dma.done [#allocation3], 128
    $region9: #{tpu_custom_call.1} parent=1 // pred_fallthru
      _
    %v21 = vld [vmem:[#allocation2] sm:$0xff]
    %22 = vrot.lane.b32.xlu0 %v21, 1
    %v23 = vpop.permute.xlu0 %22
    %24 = vst [vmem:[#allocation5] sm:$0xff] %v23
    // Predicated region
    $region10: #{tpu_custom_call.1} parent=1 // pred_check
      _
    $region11: #{tpu_custom_call.1} parent=1 // pred_check_branch
      %26 = sbr.rel (0) target = $region13
    $region12: #{tpu_custom_call.1} parent=1 // pred_region
      %s28 = ssub.s32 128, 128
      %29 = vsyncadd [#allocation4], %s28
      %s31 = sshll.u32 [#allocation5], 4
      %s32 = int_to_ptr.vmem [resolvable:$true] %s31
      %34 = dma.vmem_to_hbm [thread:$0]  %s32, 128, %s1, [#allocation4]
    $region13: #{tpu_custom_call.1} parent=1 // pred_fallthru
      _
    // Predicated region
    $region14: #{tpu_custom_call.1} parent=1 // pred_check
      _
    $region15: #{tpu_custom_call.1} parent=1 // pred_check_branch
      %36 = sbr.rel (0) target = $region17
    $region16: #{tpu_custom_call.1} parent=1 // pred_region
      %37 = dma.done [#allocation4], 128
    $region17: #{tpu_custom_call.1} parent=1 // pred_fallthru
      _
    %38 = vsyncpa [#allocation3], 1
    %39 = vsyncpa [#allocation4], 1

</llo_original>
